<compile_context>
chip_gen: v6e
topology: v6e:2x2x1
jax: 0.10.0
libtpu: 0.0.40
codegen_flags: <defaults>
</compile_context>

<pallas_src>
import functools

import jax
import jax.numpy as jnp
from jax.experimental import pallas as pl
from jax.experimental.pallas import tpu as pltpu

_LANES = 128


def _quant_gap(x, q_level, c_max):
    """Per-element quantization gap |x_mod - seq_val| (f32 in / f32 out).

    Algebraically identical to the PyTorch forward:
      * x <= 1/q            -> 0.5 * max(x, 0)   (covers the x<=0 "safe" band -> 0
                                                  and the [0, 1/q] band -> 0.5*x)
      * x >= c_max + 0.5/q  -> 0
      * otherwise           -> |x - (floor(x*q - 1e-5) + 0.5)/q|
    floor(y - eps) == round(y - 0.5 - eps) away from the eps-excluded grid
    ties, and floor is a single VPU op.
    """
    inv_q = 1.0 / q_level
    upper = c_max + 0.5 / q_level
    seq = (jnp.floor(x * q_level - 1e-05) + 0.5) * inv_q
    lo = 0.5 * jnp.maximum(x, 0.0)
    hi = jnp.where(x >= upper, 0.0, jnp.abs(x - seq))
    return jnp.where(x <= inv_q, lo, hi)


def _loss_kernel(x_ref, o_ref, *, q_level, c_max, tile_rows, num_inner, nb,
                 valid_rows, needs_mask):
    c = pl.program_id(0)   # per-core split (CORE_PARALLEL on v7x, trivial else)
    i = pl.program_id(1)   # streaming / reduction axis

    @pl.when(i == 0)
    def _():
        o_ref[...] = jnp.zeros_like(o_ref)

    # Cast in-kernel (no-op for f32) so bf16 inputs need no wrapper-side copy.
    x = x_ref[...].astype(jnp.float32)
    diff = _quant_gap(x, q_level, c_max)               # (tile_rows, 128)
    diff3 = diff.reshape(tile_rows // 8, 8, _LANES)    # vreg-group view

    if not needs_mask:
        o_ref[...] += jnp.sum(diff3, axis=0)
    else:
        # Only the last real block (possibly partial) and any clamped overflow
        # blocks need masking; interior blocks take the unmasked fast path.
        lin = c * num_inner + i
        is_edge = lin >= nb - 1

        @pl.when(jnp.logical_not(is_edge))
        def _():
            o_ref[...] += jnp.sum(diff3, axis=0)

        @pl.when(is_edge)
        def _():
            # Mask diff (not x): jnp.where is a select, so NaN/garbage in the
            # out-of-range rows of a partial block never reaches the sum.
            base = lin * tile_rows
            row = base + jax.lax.broadcasted_iota(jnp.int32, (tile_rows, 1), 0)
            masked = jnp.where(row < valid_rows, diff, 0.0)
            o_ref[...] += jnp.sum(masked.reshape(tile_rows // 8, 8, _LANES),
                                  axis=0)


def calculate_loss_pallas(x, q_level, c_max, *, tile_rows=8192, num_cores=1,
                          small_input_threshold=65536):
    """CalculateLoss forward pass; returns a scalar f32.

    num_cores=1 for v5e/v6e (single TensorCore). On v7x pass num_cores=2 to
    shard the block stream across both TensorCores via CORE_PARALLEL.
    """
    q_level = float(q_level)
    c_max = float(c_max)

    x_flat = jnp.ravel(x)
    n = x_flat.shape[0]

    # Sublane alignment by dtype packing (f32 -> 8, bf16/f16 -> 16).
    if x_flat.dtype == jnp.float32:
        sub = 8
    elif x_flat.dtype in (jnp.bfloat16, jnp.float16):
        sub = 16
    else:
        x_flat = x_flat.astype(jnp.float32)
        sub = 8

    chunk = sub * _LANES
    n_main = (n // chunk) * chunk

    # Small-input fast path (and inputs too small for even one vreg chunk):
    # pallas_call launch + grid overhead dominates there.
    if (small_input_threshold and n <= small_input_threshold) or n_main == 0:
        return jnp.sum(_quant_gap(x_flat.astype(jnp.float32), q_level, c_max))

    rows = n_main // _LANES                 # multiple of `sub`
    x2d = x_flat[:n_main].reshape(rows, _LANES)

    tr = max(sub, (min(tile_rows, rows) // sub) * sub)
    nb = pl.cdiv(rows, tr)                  # total row-blocks
    num_cores = max(1, int(num_cores))
    num_inner = pl.cdiv(nb, num_cores)      # blocks per core
    # True whenever there is a partial last block OR clamped overflow blocks
    # (invariant: num_cores*num_inner > nb  =>  needs_mask).
    needs_mask = (num_cores * num_inner * tr) != rows

    kernel = functools.partial(
        _loss_kernel,
        q_level=q_level,
        c_max=c_max,
        tile_rows=tr,
        num_inner=num_inner,
        nb=nb,
        valid_rows=rows,
        needs_mask=needs_mask,
    )

    def in_map(c, i):
        # Clamp overflow blocks (nb not a multiple of num_cores) onto a valid
        # block; the in-kernel edge mask zeroes their contribution.
        return (jnp.minimum(c * num_inner + i, nb - 1), 0)

    if num_cores > 1:
        dim_sem = (pltpu.CORE_PARALLEL, pltpu.ARBITRARY)   # engage both TCs (v7x)
    else:
        dim_sem = ("arbitrary", "arbitrary")

    out = pl.pallas_call(
        kernel,
        out_shape=jax.ShapeDtypeStruct((num_cores * 8, _LANES), jnp.float32),
        grid_spec=pltpu.PrefetchScalarGridSpec(
            num_scalar_prefetch=0,
            grid=(num_cores, num_inner),
            in_specs=[pl.BlockSpec((tr, _LANES), in_map)],
            # Output block index ignores i -> resident per-core accumulator.
            out_specs=pl.BlockSpec((8, _LANES), lambda c, i: (c, 0)),
        ),
        compiler_params=pltpu.CompilerParams(
            dimension_semantics=dim_sem,
            vmem_limit_bytes=32 * 1024 * 1024,
        ),
        cost_estimate=pl.CostEstimate(
            flops=14 * n_main,
            transcendentals=0,
            bytes_accessed=x2d.dtype.itemsize * n_main
            + num_cores * 8 * _LANES * 4,
        ),
    )(x2d)

    # Final cross-core / cross-lane reduce of the tiny (8,128) partial slabs.
    total = jnp.sum(out)

    # Pure-JAX sum of the < chunk-sized remainder (avoids a whole-array pad).
    if n_main < n:
        tail = x_flat[n_main:].astype(jnp.float32)
        total = total + jnp.sum(_quant_gap(tail, q_level, c_max))
    return total


def calculate_loss_ref(x, q_level, c_max):
    """Pure-JAX reference mirroring the PyTorch forward, for sanity checking."""
    x = x.astype(jnp.float32)
    safe_zero = x <= 0.0
    safe_one = x >= (c_max + 0.5 / q_level)
    x_scaled = x * q_level
    k = 2.0 * jnp.round(x_scaled - 0.5 - 1e-05) + 1.0
    seq_val = k * 0.5 / q_level
    in_band = (x >= 0.0) & (x <= 1.0 / q_level)
    seq_val = jnp.where(in_band, 0.0, seq_val)
    seq_val = jnp.where(safe_zero, x, seq_val)
    seq_val = jnp.where(safe_one, x, seq_val)
    x_mod = jnp.where(in_band, 0.5 * x, x)
    return jnp.sum(jnp.abs(x_mod - seq_val))


if __name__ == "__main__":
    # Module hyperparameters (deterministic, in-script).
    q_level = 4.0
    c_max = 1.0

    # Small NCHW activation map consistent with the module.  Force the Pallas
    # path (the default wrapper would take the small-input pure-JAX shortcut).
    key = jax.random.PRNGKey(0)
    x = jax.random.uniform(
        key, (2, 4, 16, 16), jnp.float32, minval=-0.5, maxval=1.5
    )
    loss = jax.block_until_ready(
        calculate_loss_pallas(x, q_level, c_max, small_input_threshold=0)
    )
    ref = calculate_loss_ref(x, q_level, c_max)
    assert jnp.allclose(loss, ref, rtol=1e-5, atol=1e-5), (loss, ref)

    # Non-vreg-aligned size: exercises the pure-JAX tail-remainder path.
    x_odd = jax.random.uniform(
        jax.random.PRNGKey(1), (3, 5, 7, 11), jnp.float32, minval=-0.5, maxval=1.5
    )
    loss_odd = jax.block_until_ready(
        calculate_loss_pallas(x_odd, q_level, c_max, small_input_threshold=0)
    )
    ref_odd = calculate_loss_ref(x_odd, q_level, c_max)
    assert jnp.allclose(loss_odd, ref_odd, rtol=1e-5, atol=1e-5), (loss_odd, ref_odd)

    # Larger input: multiple grid steps + in-kernel masked partial last block.
    x_big = jax.random.uniform(
        jax.random.PRNGKey(2), (8, 16, 128, 129), jnp.float32, minval=-0.5, maxval=1.5
    )
    loss_big = jax.block_until_ready(calculate_loss_pallas(x_big, q_level, c_max))
    ref_big = calculate_loss_ref(x_big, q_level, c_max)
    assert jnp.allclose(loss_big, ref_big, rtol=1e-4, atol=1e-2), (loss_big, ref_big)

    print("KERNEL_OK")
</pallas_src>

<mosaic_0001>
module attributes {stable_mosaic.version = 11 : i64} {
  func.func @_loss_kernel(%arg0: i32, %arg1: i32, %arg2: memref<16x128xf32, #tpu.memory_space<vmem>>, %arg3: memref<8x128xf32, #tpu.memory_space<vmem>>) attributes {dimension_semantics = [#tpu.dimension_semantics<arbitrary>, #tpu.dimension_semantics<arbitrary>], iteration_bounds = array<i64: 1, 1>, scalar_prefetch = 0 : i64, scratch_operands = 0 : i64, tpu.core_type = #tpu.core_type<tc>, window_params = [{transform_indices = @transform_0, window_bounds = array<i64: 16, 128>}, {transform_indices = @transform_1, window_bounds = array<i64: 8, 128>}]} {
    %c0_i32 = arith.constant 0 : i32
    %0 = arith.cmpi eq, %arg1, %c0_i32 : i32
    %1 = arith.extui %0 : i1 to i32
    %c0_i32_0 = arith.constant 0 : i32
    %2 = arith.cmpi ne, %1, %c0_i32_0 : i32
    scf.if %2 {
      %cst_15 = arith.constant 0.000000e+00 : f32
      %31 = vector.broadcast %cst_15 : f32 to vector<8x128xf32>
      %c0_16 = arith.constant 0 : index
      %c0_17 = arith.constant 0 : index
      %32 = vector.load %arg3[%c0_16, %c0_17] : memref<8x128xf32, #tpu.memory_space<vmem>>, vector<8x128xf32>
      tpu.vector_store %arg3[%c0_16, %c0_17], %31 {strides = array<i32>} : memref<8x128xf32, #tpu.memory_space<vmem>>, vector<8x128xf32>,
    } else {
    }
    %c0 = arith.constant 0 : index
    %c0_1 = arith.constant 0 : index
    %3 = vector.load %arg2[%c0, %c0_1] : memref<16x128xf32, #tpu.memory_space<vmem>>, vector<16x128xf32>
    %cst = arith.constant 4.000000e+00 : f32
    %4 = vector.broadcast %cst : f32 to vector<16x128xf32>
    %5 = arith.mulf %3, %4 : vector<16x128xf32>
    %cst_2 = arith.constant 9.99999974E-6 : f32
    %6 = vector.broadcast %cst_2 : f32 to vector<16x128xf32>
    %7 = arith.subf %5, %6 : vector<16x128xf32>
    %8 = math.floor %7 : vector<16x128xf32>
    %cst_3 = arith.constant 5.000000e-01 : f32
    %9 = vector.broadcast %cst_3 : f32 to vector<16x128xf32>
    %10 = arith.addf %8, %9 : vector<16x128xf32>
    %cst_4 = arith.constant 2.500000e-01 : f32
    %11 = vector.broadcast %cst_4 : f32 to vector<16x128xf32>
    %12 = arith.mulf %10, %11 : vector<16x128xf32>
    %cst_5 = arith.constant 0.000000e+00 : f32
    %13 = vector.broadcast %cst_5 : f32 to vector<16x128xf32>
    %14 = arith.maximumf %3, %13 : vector<16x128xf32>
    %cst_6 = arith.constant 5.000000e-01 : f32
    %15 = vector.broadcast %cst_6 : f32 to vector<16x128xf32>
    %16 = arith.mulf %15, %14 : vector<16x128xf32>
    %cst_7 = arith.constant 1.125000e+00 : f32
    %17 = vector.broadcast %cst_7 : f32 to vector<16x128xf32>
    %18 = arith.cmpf oge, %3, %17 : vector<16x128xf32>
    %19 = arith.subf %3, %12 : vector<16x128xf32>
    %20 = math.absf %19 : vector<16x128xf32>
    %cst_8 = arith.constant 0.000000e+00 : f32
    %21 = vector.broadcast %cst_8 : f32 to vector<16x128xf32>
    %22 = arith.select %18, %21, %20 : vector<16x128xi1>, vector<16x128xf32>
    %cst_9 = arith.constant 2.500000e-01 : f32
    %23 = vector.broadcast %cst_9 : f32 to vector<16x128xf32>
    %24 = arith.cmpf ole, %3, %23 : vector<16x128xf32>
    %25 = arith.select %24, %16, %22 : vector<16x128xi1>, vector<16x128xf32>
    %26 = vector.shape_cast %25 : vector<16x128xf32> to vector<2x8x128xf32>
    %c0_10 = arith.constant 0 : index
    %c0_11 = arith.constant 0 : index
    %27 = vector.load %arg3[%c0_10, %c0_11] : memref<8x128xf32, #tpu.memory_space<vmem>>, vector<8x128xf32>
    %cst_12 = arith.constant dense<0.000000e+00> : vector<8x128xf32>
    %28 = vector.multi_reduction <add>, %26, %cst_12 [0] : vector<2x8x128xf32> to vector<8x128xf32>
    %29 = arith.addf %27, %28 : vector<8x128xf32>
    %c0_13 = arith.constant 0 : index
    %c0_14 = arith.constant 0 : index
    %30 = vector.load %arg3[%c0_13, %c0_14] : memref<8x128xf32, #tpu.memory_space<vmem>>, vector<8x128xf32>
    tpu.vector_store %arg3[%c0_13, %c0_14], %29 {strides = array<i32>} : memref<8x128xf32, #tpu.memory_space<vmem>>, vector<8x128xf32>,
    return
  }
  func.func @transform_0(%arg0: i32, %arg1: i32) -> (i32, i32) {
    %c1_i32 = arith.constant 1 : i32
    %0 = arith.muli %arg0, %c1_i32 : i32
    %1 = arith.addi %0, %arg1 : i32
    %c0_i32 = arith.constant 0 : i32
    %2 = arith.minsi %1, %c0_i32 : i32
    %c0_i32_0 = arith.constant 0 : i32
    %c0_i32_1 = arith.constant 0 : i32
    return %2, %c0_i32_0 : i32, i32
  }
  func.func @transform_1(%arg0: i32, %arg1: i32) -> (i32, i32) {
    %c0_i32 = arith.constant 0 : i32
    %c0_i32_0 = arith.constant 0 : i32
    return %arg0, %c0_i32 : i32, i32
  }
}

</mosaic_0001>

<llo_original>
// kernel: tpu_custom_call.1
$region0: #{tpu_custom_call.1}
  #allocation0 [shape = 'u32[]', space=smem, size = 0x4, offset = 0x4, fixed_abs, tag = 'smem constant byte address 0x4 - core index']
  #allocation1 [shape = 'u32[144,128]{1,0:T(1,128)}', space=vmem, size = 0x12000, scoped, tag = 'internal scratch']
  %s0 = inlined_call_operand.hbm [shape: f32[16,128], index: 0, kind: input, shape index: {}]
  %s1 = inlined_call_operand.hbm [shape: f32[8,128], index: 1, kind: output, shape index: {}]
  %s2 = sld [smem:[#allocation0]]
  $region22: #{tpu_custom_call.1} parent=0
    _
  %s4 = ssub.s32 1, %s2
  %s5 = scalar_select 0, %s4, %s2
  $region1: #{tpu_custom_call.1} parent=0
    #allocation2 [shape = 'u8[8192]{0}', space=vmem, size = 0x2000, scoped, tag = 'input window, operand 0, single buffered']
    #allocation3 [shape = 's32[1]{0}', space=sflag, size = 0x4, scoped, tag = 'scoped memory for tpu_custom_call.1']
    #allocation4 [shape = 's32[1]{0}', space=sflag, size = 0x4, scoped, tag = 'scoped memory for tpu_custom_call.1']
    #allocation5 [shape = 'u8[4096]{0}', space=vmem, size = 0x1000, scoped, tag = 'output window, operand 0, single buffered']
    %6 = vsyncpa [#allocation3], 0
    %7 = vsyncpa [#allocation4], 0
    // Predicated region
    $region2: #{tpu_custom_call.1} parent=1 // pred_check
      _
    $region3: #{tpu_custom_call.1} parent=1 // pred_check_branch
      %9 = sbr.rel (0) target = $region5
    $region4: #{tpu_custom_call.1} parent=1 // pred_region
      %s10 = sadd.s32 0, 0
      %p11 = scmp.lt.s32.totalorder %s10, 0
      %s12 = scalar_select %p11, %s10, 0
      %s13 = smul.u32 2, %s12
      %s15 = ssub.s32 256, 256
      %16 = vsyncadd [#allocation3], %s15
      %s17 = smul.addr %s13, 128
      %s18 = scalar_lea.hbm %s0, %s17
      %s19 = sshll.u32 [#allocation2], 4
      %s20 = int_to_ptr.vmem [resolvable:$true] %s19
      %25 = dma.hbm_to_vmem [thread:$0]  %s18, 256, %s20, [#allocation3], 128, 128, 8
    $region5: #{tpu_custom_call.1} parent=1 // pred_fallthru
      _
    // Predicated region
    $region6: #{tpu_custom_call.1} parent=1 // pred_check
      _
    $region7: #{tpu_custom_call.1} parent=1 // pred_check_branch
      %27 = sbr.rel (0) target = $region9
    $region8: #{tpu_custom_call.1} parent=1 // pred_region
      %28 = dma.done [#allocation3], 256
    $region9: #{tpu_custom_call.1} parent=1 // pred_fallthru
      _
    %s29 = sadd.s32 0, 0
    %p30 = scmp.lt.s32.totalorder %s29, 0
    %s31 = scalar_select %p30, %s29, 0
    %s32 = smul.u32 2, %s31
    %p33 = scmp.eq.s32.totalorder 0, 0
    // Predicated region
    $region10: #{tpu_custom_call.1} parent=1 // pred_check
      %p34 = pneg %p33
    $region11: #{tpu_custom_call.1} parent=1 // pred_check_branch
      %36 = sbr.rel (%p34) target = $region13
    $region12: #{tpu_custom_call.1} parent=1 // pred_region
      %37 = vst [vmem:[#allocation5] sm:$0xff] 0.0
    $region13: #{tpu_custom_call.1} parent=1 // pred_fallthru
      _
    %v38 = vld [vmem:[#allocation2] sm:$0xff]
    %v39 = vld [vmem:[#allocation2 + $0x8] sm:$0xff]
    %v40 = vmul.f32 %v38, 4.0
    %v41 = vmul.f32 %v39, 4.0
    %v42 = vsub.f32 %v40, 1e-05
    %v43 = vsub.f32 %v41, 1e-05
    %v44 = vfloor.f32 %v42
    %v45 = vfloor.f32 %v43
    %v46 = vadd.f32 %v44, 0.5
    %v47 = vadd.f32 %v45, 0.5
    %v48 = vmul.f32 %v46, 0.25
    %v49 = vmul.f32 %v47, 0.25
    %v50 = vmax.f32 %v38, 0.0
    %v51 = vmax.f32 %v39, 0.0
    %v52 = vmul.f32 %v50, 0.5
    %v53 = vmul.f32 %v51, 0.5
    %vm54 = vcmp.ge.f32.partialorder %v38, 1.125
    %vm55 = vcmp.ge.f32.partialorder %v39, 1.125
    %v56 = vsub.f32 %v38, %v48
    %v57 = vsub.f32 %v39, %v49
    %v58 = vand.u32 2147483647, %v56
    %v59 = vand.u32 2147483647, %v57
    %v60 = vsel %vm54, 0.0, %v58
    %v61 = vsel %vm55, 0.0, %v59
    %vm62 = vcmp.le.f32.partialorder %v38, 0.25
    %vm63 = vcmp.le.f32.partialorder %v39, 0.25
    %v64 = vsel %vm62, %v52, %v60
    %v65 = vsel %vm63, %v53, %v61
    %v66 = vld [vmem:[#allocation5] sm:$0xff]
    %v67 = vadd.f32 %v64, %v65
    %v68 = vadd.f32 %v66, %v67
    %69 = vst [vmem:[#allocation5] sm:$0xff] %v68
    // Predicated region
    $region14: #{tpu_custom_call.1} parent=1 // pred_check
      _
    $region15: #{tpu_custom_call.1} parent=1 // pred_check_branch
      %71 = sbr.rel (0) target = $region17
    $region16: #{tpu_custom_call.1} parent=1 // pred_region
      %s73 = ssub.s32 128, 128
      %74 = vsyncadd [#allocation4], %s73
      %s76 = sshll.u32 [#allocation5], 4
      %s77 = int_to_ptr.vmem [resolvable:$true] %s76
      %79 = dma.vmem_to_hbm [thread:$0]  %s77, 128, %s1, [#allocation4]
    $region17: #{tpu_custom_call.1} parent=1 // pred_fallthru
      _
    // Predicated region
    $region18: #{tpu_custom_call.1} parent=1 // pred_check
      _
    $region19: #{tpu_custom_call.1} parent=1 // pred_check_branch
      %81 = sbr.rel (0) target = $region21
    $region20: #{tpu_custom_call.1} parent=1 // pred_region
      %82 = dma.done [#allocation4], 128
    $region21: #{tpu_custom_call.1} parent=1 // pred_fallthru
      _
    %83 = vsyncpa [#allocation3], 1
    %84 = vsyncpa [#allocation4], 1

</llo_original>
